<compile_context>
chip_gen: v7x
topology: tpu7x:2x2x1
jax: 0.10.0
libtpu: 0.0.40
codegen_flags: <defaults>
</compile_context>

<pallas_src>
import functools

import jax
import jax.numpy as jnp
from jax.experimental import pallas as pl
from jax.experimental.pallas import tpu as pltpu


# ----------------------------------------------------------------------------
# Pallas kernel: one fused gate matmul + output matmul, elementwise gates,
# fractional-difference filter over the K history slabs, history shift.
# ----------------------------------------------------------------------------
def _mlstm_kernel(k, hidden_size,
                  xhd_ref, cell_ref, wg_ref, bg_ref, wout_ref, bout_ref,
                  out_ref, hid_out_ref, hc1_ref, dval_ref):
    H = hidden_size
    xhd = xhd_ref[...]                                 # (B, I+2H) = [x | h | d0]

    # Single fused MXU matmul for all four gates; column blocks [c | i | f | o].
    # (c/i/o rows for the d0 slice are zero, so this is numerically the same
    #  computation as the four separate nn.Linear layers.)
    gates = (jnp.dot(xhd, wg_ref[...], preferred_element_type=jnp.float32)
             + bg_ref[...])                            # (B, 4H)

    c_t = jnp.tanh(gates[:, 0 * H:1 * H])
    i_g = jax.nn.sigmoid(gates[:, 1 * H:2 * H])
    d_values = jax.nn.sigmoid(gates[:, 2 * H:3 * H]) * 0.5
    o_g = jax.nn.sigmoid(gates[:, 3 * H:4 * H])

    # filter_d: per-element fractional-difference binomial weights.
    # get_ws recurrence: w_{k-1-m} = w_{k-m} * (m - d) / (m + 1), w_k = 1.
    # Divide replaced by constant-reciprocal multiply (serial VPU chain).
    filtered = jnp.zeros_like(d_values)
    w = jnp.ones_like(d_values)
    for m in range(k):                                 # k is a static int >= 1
        w = w * ((jnp.float32(m) - d_values) * jnp.float32(1.0 / (m + 1)))
        filtered = filtered + cell_ref[k - 1 - m] * w

    # cell = first + second = -filtered + c_tilde * i_gate
    cell_new = c_t * i_g - filtered                    # (B, H)

    # h_c_1 = cat([cell_tensor, cell_new[None]], 0)[1:]  (shift history by 1)
    # Done as one bulk copy; output HBM buffer aliases the cell_tensor input.
    if k > 1:
        hc1_ref[0:k - 1] = cell_ref[1:k]
    hc1_ref[k - 1] = cell_new

    hid_new = jnp.tanh(cell_new) * o_g
    hid_out_ref[...] = hid_new
    dval_ref[...] = d_values
    out_ref[...] = (jnp.dot(hid_new, wout_ref[...],
                            preferred_element_type=jnp.float32)
                    + bout_ref[...])


# ----------------------------------------------------------------------------
# Wrapper: whole-array blocks in VMEM (shapes are tiny), single invocation.
# For a real time loop, wrap this in a grid over timesteps with weight
# BlockSpecs whose index_map always returns (0, 0) so weights stay
# VMEM-resident and only activations/cell state stream per step.
# ----------------------------------------------------------------------------
@functools.partial(jax.jit, static_argnums=(5,))
def mlstm_cell_pallas(sample, hidden, cell_tensor, d_0, packed, k):
    assert k >= 1, "MLSTMCell requires k >= 1"
    B = sample.shape[0]
    H = hidden.shape[1]
    O = packed["wout"].shape[1]

    # One lane-contiguous activation slab; the in-kernel matmul contracts over
    # the full I+2H dimension in a single MXU push.
    xhd = jnp.concatenate([sample, hidden, d_0], axis=1)   # (B, I+2H)

    vmem = pl.BlockSpec(memory_space=pltpu.MemorySpace.VMEM)
    kernel = functools.partial(_mlstm_kernel, k, H)

    out_shape = (
        jax.ShapeDtypeStruct((B, O), jnp.float32),     # output
        jax.ShapeDtypeStruct((B, H), jnp.float32),     # new hidden
        jax.ShapeDtypeStruct((k, B, H), jnp.float32),  # h_c_1
        jax.ShapeDtypeStruct((B, H), jnp.float32),     # d_values
    )

    return pl.pallas_call(
        kernel,
        out_shape=out_shape,
        in_specs=[vmem] * 6,
        out_specs=tuple([vmem] * 4),
        input_output_aliases={1: 2},   # cell_tensor buffer -> h_c_1 output
    )(xhd, cell_tensor,
      packed["w_gates"], packed["b_gates"],
      packed["wout"], packed["bout"])


# ----------------------------------------------------------------------------
# One-time weight packing (done at init, not per call): fuse the four gate
# Linear layers into a single (I+2H, 4H) weight + (1, 4H) bias.
# Column blocks: [c | i | f | o]; the d_0 rows of c/i/o are zero.
# ----------------------------------------------------------------------------
def pack_params(params, input_size, hidden_size):
    I, H = input_size, hidden_size
    del I  # shape checked implicitly by concatenation
    zpad = jnp.zeros((H, H), jnp.float32)              # d_0 rows for c/i/o
    wc = jnp.concatenate([params["wc_x"], params["wc_h"], zpad], axis=0)
    wi = jnp.concatenate([params["wi_x"], params["wi_h"], zpad], axis=0)
    wf = jnp.concatenate([params["wf_x"], params["wf_h"], params["wf_d"]],
                         axis=0)
    wo = jnp.concatenate([params["wo_x"], params["wo_h"], zpad], axis=0)
    w_gates = jnp.concatenate([wc, wi, wf, wo], axis=1)          # (I+2H, 4H)
    b_gates = jnp.concatenate(
        [params["bc"], params["bi"], params["bf"], params["bo"]], axis=1)
    return dict(w_gates=w_gates, b_gates=b_gates,
                wout=params["wout"], bout=params["bout"])


# ----------------------------------------------------------------------------
# Pure-JAX reference (mirrors the PyTorch forward exactly) for verification.
# ----------------------------------------------------------------------------
def mlstm_cell_ref(sample, hidden, cell_tensor, d_0, params, k):
    d_lin = (sample @ params["wf_x"] + hidden @ params["wf_h"]
             + d_0 @ params["wf_d"] + params["bf"])
    d_values = jax.nn.sigmoid(d_lin) * 0.5

    filtered = jnp.zeros_like(d_values)
    w = jnp.ones_like(d_values)
    for m in range(k):
        w = w * (m - d_values) / (m + 1)
        filtered = filtered + cell_tensor[k - 1 - m] * w
    first = -filtered

    i_g = jax.nn.sigmoid(sample @ params["wi_x"] + hidden @ params["wi_h"]
                         + params["bi"])
    o_g = jax.nn.sigmoid(sample @ params["wo_x"] + hidden @ params["wo_h"]
                         + params["bo"])
    c_t = jnp.tanh(sample @ params["wc_x"] + hidden @ params["wc_h"]
                   + params["bc"])
    cell_new = first + c_t * i_g
    hc1 = jnp.concatenate([cell_tensor, cell_new[None]], axis=0)[1:]
    hid_new = jnp.tanh(cell_new) * o_g
    output = hid_new @ params["wout"] + params["bout"]
    return output, hid_new, hc1, d_values


# ----------------------------------------------------------------------------
# Deterministic parameter init (torch.nn.Linear-style uniform ±1/sqrt(fan_in))
# ----------------------------------------------------------------------------
def init_params(key, input_size, hidden_size, output_size):
    def linear(key, fan_in, fan_out):
        kw, kb = jax.random.split(key)
        bound = 1.0 / jnp.sqrt(jnp.float32(fan_in))
        w = jax.random.uniform(kw, (fan_in, fan_out), jnp.float32, -bound, bound)
        b = jax.random.uniform(kb, (1, fan_out), jnp.float32, -bound, bound)
        return w, b

    keys = jax.random.split(key, 5)
    I, H, O = input_size, hidden_size, output_size
    wc, bc = linear(keys[0], I + H, H)
    wi, bi = linear(keys[1], I + H, H)
    wf, bf = linear(keys[2], I + 2 * H, H)
    wo, bo = linear(keys[3], I + H, H)
    wout, bout = linear(keys[4], H, O)

    return dict(
        wc_x=wc[:I], wc_h=wc[I:], bc=bc,
        wi_x=wi[:I], wi_h=wi[I:], bi=bi,
        wf_x=wf[:I], wf_h=wf[I:I + H], wf_d=wf[I + H:], bf=bf,
        wo_x=wo[:I], wo_h=wo[I:], bo=bo,
        wout=wout, bout=bout,
    )


if __name__ == "__main__":
    B, I, H, K, O = 4, 8, 32, 4, 8

    key = jax.random.PRNGKey(0)
    k_params, k_x, k_h, k_c, k_d = jax.random.split(key, 5)
    params = init_params(k_params, I, H, O)
    packed = jax.tree_util.tree_map(jax.block_until_ready,
                                    pack_params(params, I, H))

    sample = jax.random.normal(k_x, (B, I), jnp.float32)
    hidden = jax.random.normal(k_h, (B, H), jnp.float32)
    cell_tensor = jax.random.normal(k_c, (K, B, H), jnp.float32)
    d_0 = jax.random.uniform(k_d, (B, H), jnp.float32, 0.0, 0.5)

    # Reference first (the kernel output aliases the cell_tensor HBM buffer).
    ref_out, ref_hid, ref_hc1, ref_dvals = mlstm_cell_ref(
        sample, hidden, cell_tensor, d_0, params, K)

    out, hid, hc1, dvals = jax.block_until_ready(
        mlstm_cell_pallas(sample, hidden, cell_tensor, d_0, packed, K))

    assert jnp.allclose(out, ref_out, rtol=1e-4, atol=1e-4)
    assert jnp.allclose(hid, ref_hid, rtol=1e-4, atol=1e-4)
    assert jnp.allclose(hc1, ref_hc1, rtol=1e-4, atol=1e-4)
    assert jnp.allclose(dvals, ref_dvals, rtol=1e-4, atol=1e-4)

    print("KERNEL_OK")
</pallas_src>

<mosaic_0001>
module attributes {stable_mosaic.version = 11 : i64} {
  func.func @_mlstm_kernel(%arg0: memref<4x72xf32, #tpu.memory_space<vmem>>, %arg1: memref<4x4x32xf32, #tpu.memory_space<vmem>>, %arg2: memref<72x128xf32, #tpu.memory_space<vmem>>, %arg3: memref<1x128xf32, #tpu.memory_space<vmem>>, %arg4: memref<32x8xf32, #tpu.memory_space<vmem>>, %arg5: memref<1x8xf32, #tpu.memory_space<vmem>>, %arg6: memref<4x8xf32, #tpu.memory_space<vmem>>, %arg7: memref<4x32xf32, #tpu.memory_space<vmem>>, %arg8: memref<4x4x32xf32, #tpu.memory_space<vmem>>, %arg9: memref<4x32xf32, #tpu.memory_space<vmem>>) attributes {dimension_semantics = [], scalar_prefetch = 0 : i64, scratch_operands = 0 : i64, tpu.core_type = #tpu.core_type<tc>} {
    %c0 = arith.constant 0 : index
    %c0_0 = arith.constant 0 : index
    %0 = vector.load %arg0[%c0, %c0_0] : memref<4x72xf32, #tpu.memory_space<vmem>>, vector<4x72xf32>
    %c0_1 = arith.constant 0 : index
    %c0_2 = arith.constant 0 : index
    %1 = vector.load %arg2[%c0_1, %c0_2] : memref<72x128xf32, #tpu.memory_space<vmem>>, vector<72x128xf32>
    %cst = arith.constant dense<0.000000e+00> : vector<4x128xf32>
    %2 = tpu.matmul %0, %1, %cst {dimension_numbers = #tpu.dot_dimension_numbers<[1], [0], [0], [1], [0, 0, 1, 1], [], []>} : vector<4x72xf32>, vector<72x128xf32>, vector<4x128xf32> -> vector<4x128xf32>
    %c0_3 = arith.constant 0 : index
    %c0_4 = arith.constant 0 : index
    %3 = vector.load %arg3[%c0_3, %c0_4] : memref<1x128xf32, #tpu.memory_space<vmem>>, vector<1x128xf32>
    %4 = vector.broadcast %3 : vector<1x128xf32> to vector<4x128xf32>
    %5 = arith.addf %2, %4 : vector<4x128xf32>
    %6 = vector.extract_strided_slice %5 {offsets = [0, 0], sizes = [4, 32], strides = [1, 1]} : vector<4x128xf32> to vector<4x32xf32>
    %7 = math.tanh %6 : vector<4x32xf32>
    %8 = vector.extract_strided_slice %5 {offsets = [0, 32], sizes = [4, 32], strides = [1, 1]} : vector<4x128xf32> to vector<4x32xf32>
    %9 = arith.negf %8 : vector<4x32xf32>
    %10 = math.exp %9 : vector<4x32xf32>
    %cst_5 = arith.constant 1.000000e+00 : f32
    %11 = vector.broadcast %cst_5 : f32 to vector<4x32xf32>
    %12 = arith.addf %11, %10 : vector<4x32xf32>
    %13 = arith.divf %11, %12 : vector<4x32xf32>
    %14 = vector.extract_strided_slice %5 {offsets = [0, 64], sizes = [4, 32], strides = [1, 1]} : vector<4x128xf32> to vector<4x32xf32>
    %15 = arith.negf %14 : vector<4x32xf32>
    %16 = math.exp %15 : vector<4x32xf32>
    %cst_6 = arith.constant 1.000000e+00 : f32
    %17 = vector.broadcast %cst_6 : f32 to vector<4x32xf32>
    %18 = arith.addf %17, %16 : vector<4x32xf32>
    %19 = arith.divf %17, %18 : vector<4x32xf32>
    %cst_7 = arith.constant 5.000000e-01 : f32
    %20 = vector.broadcast %cst_7 : f32 to vector<4x32xf32>
    %21 = arith.mulf %19, %20 : vector<4x32xf32>
    %22 = vector.extract_strided_slice %5 {offsets = [0, 96], sizes = [4, 32], strides = [1, 1]} : vector<4x128xf32> to vector<4x32xf32>
    %23 = arith.negf %22 : vector<4x32xf32>
    %24 = math.exp %23 : vector<4x32xf32>
    %cst_8 = arith.constant 1.000000e+00 : f32
    %25 = vector.broadcast %cst_8 : f32 to vector<4x32xf32>
    %26 = arith.addf %25, %24 : vector<4x32xf32>
    %27 = arith.divf %25, %26 : vector<4x32xf32>
    %cst_9 = arith.constant 0.000000e+00 : f32
    %28 = vector.broadcast %cst_9 : f32 to vector<4x32xf32>
    %cst_10 = arith.constant 1.000000e+00 : f32
    %29 = vector.broadcast %cst_10 : f32 to vector<4x32xf32>
    %cst_11 = arith.constant 0.000000e+00 : f32
    %30 = vector.broadcast %cst_11 : f32 to vector<4x32xf32>
    %31 = arith.subf %30, %21 : vector<4x32xf32>
    %cst_12 = arith.constant 1.000000e+00 : f32
    %32 = vector.broadcast %cst_12 : f32 to vector<4x32xf32>
    %33 = arith.mulf %31, %32 : vector<4x32xf32>
    %34 = arith.mulf %29, %33 : vector<4x32xf32>
    %c3 = arith.constant 3 : index
    %c0_13 = arith.constant 0 : index
    %c0_14 = arith.constant 0 : index
    %35 = vector.load %arg1[%c3, %c0_13, %c0_14] : memref<4x4x32xf32, #tpu.memory_space<vmem>>, vector<1x4x32xf32>
    %36 = vector.shape_cast %35 : vector<1x4x32xf32> to vector<4x32xf32>
    %37 = arith.mulf %36, %34 : vector<4x32xf32>
    %38 = arith.addf %28, %37 : vector<4x32xf32>
    %cst_15 = arith.constant 1.000000e+00 : f32
    %39 = vector.broadcast %cst_15 : f32 to vector<4x32xf32>
    %40 = arith.subf %39, %21 : vector<4x32xf32>
    %cst_16 = arith.constant 5.000000e-01 : f32
    %41 = vector.broadcast %cst_16 : f32 to vector<4x32xf32>
    %42 = arith.mulf %40, %41 : vector<4x32xf32>
    %43 = arith.mulf %34, %42 : vector<4x32xf32>
    %c2 = arith.constant 2 : index
    %c0_17 = arith.constant 0 : index
    %c0_18 = arith.constant 0 : index
    %44 = vector.load %arg1[%c2, %c0_17, %c0_18] : memref<4x4x32xf32, #tpu.memory_space<vmem>>, vector<1x4x32xf32>
    %45 = vector.shape_cast %44 : vector<1x4x32xf32> to vector<4x32xf32>
    %46 = arith.mulf %45, %43 : vector<4x32xf32>
    %47 = arith.addf %38, %46 : vector<4x32xf32>
    %cst_19 = arith.constant 2.000000e+00 : f32
    %48 = vector.broadcast %cst_19 : f32 to vector<4x32xf32>
    %49 = arith.subf %48, %21 : vector<4x32xf32>
    %cst_20 = arith.constant 0.333333343 : f32
    %50 = vector.broadcast %cst_20 : f32 to vector<4x32xf32>
    %51 = arith.mulf %49, %50 : vector<4x32xf32>
    %52 = arith.mulf %43, %51 : vector<4x32xf32>
    %c1 = arith.constant 1 : index
    %c0_21 = arith.constant 0 : index
    %c0_22 = arith.constant 0 : index
    %53 = vector.load %arg1[%c1, %c0_21, %c0_22] : memref<4x4x32xf32, #tpu.memory_space<vmem>>, vector<1x4x32xf32>
    %54 = vector.shape_cast %53 : vector<1x4x32xf32> to vector<4x32xf32>
    %55 = arith.mulf %54, %52 : vector<4x32xf32>
    %56 = arith.addf %47, %55 : vector<4x32xf32>
    %cst_23 = arith.constant 3.000000e+00 : f32
    %57 = vector.broadcast %cst_23 : f32 to vector<4x32xf32>
    %58 = arith.subf %57, %21 : vector<4x32xf32>
    %cst_24 = arith.constant 2.500000e-01 : f32
    %59 = vector.broadcast %cst_24 : f32 to vector<4x32xf32>
    %60 = arith.mulf %58, %59 : vector<4x32xf32>
    %61 = arith.mulf %52, %60 : vector<4x32xf32>
    %c0_25 = arith.constant 0 : index
    %c0_26 = arith.constant 0 : index
    %c0_27 = arith.constant 0 : index
    %62 = vector.load %arg1[%c0_25, %c0_26, %c0_27] : memref<4x4x32xf32, #tpu.memory_space<vmem>>, vector<1x4x32xf32>
    %63 = vector.shape_cast %62 : vector<1x4x32xf32> to vector<4x32xf32>
    %64 = arith.mulf %63, %61 : vector<4x32xf32>
    %65 = arith.addf %56, %64 : vector<4x32xf32>
    %66 = arith.mulf %7, %13 : vector<4x32xf32>
    %67 = arith.subf %66, %65 : vector<4x32xf32>
    %c1_28 = arith.constant 1 : index
    %c0_29 = arith.constant 0 : index
    %c0_30 = arith.constant 0 : index
    %68 = vector.load %arg1[%c1_28, %c0_29, %c0_30] : memref<4x4x32xf32, #tpu.memory_space<vmem>>, vector<3x4x32xf32>
    %c0_31 = arith.constant 0 : index
    %c0_32 = arith.constant 0 : index
    %c0_33 = arith.constant 0 : index
    %69 = vector.load %arg8[%c0_31, %c0_32, %c0_33] : memref<4x4x32xf32, #tpu.memory_space<vmem>>, vector<3x4x32xf32>
    tpu.vector_store %arg8[%c0_31, %c0_32, %c0_33], %68 {strides = array<i32>} : memref<4x4x32xf32, #tpu.memory_space<vmem>>, vector<3x4x32xf32>,
    %c3_34 = arith.constant 3 : index
    %c0_35 = arith.constant 0 : index
    %c0_36 = arith.constant 0 : index
    %70 = vector.load %arg8[%c3_34, %c0_35, %c0_36] : memref<4x4x32xf32, #tpu.memory_space<vmem>>, vector<1x4x32xf32>
    %71 = vector.shape_cast %70 : vector<1x4x32xf32> to vector<4x32xf32>
    %72 = vector.shape_cast %67 : vector<4x32xf32> to vector<1x4x32xf32>
    tpu.vector_store %arg8[%c3_34, %c0_35, %c0_36], %72 {strides = array<i32>} : memref<4x4x32xf32, #tpu.memory_space<vmem>>, vector<1x4x32xf32>,
    %73 = math.tanh %67 : vector<4x32xf32>
    %74 = arith.mulf %73, %27 : vector<4x32xf32>
    %c0_37 = arith.constant 0 : index
    %c0_38 = arith.constant 0 : index
    %75 = vector.load %arg7[%c0_37, %c0_38] : memref<4x32xf32, #tpu.memory_space<vmem>>, vector<4x32xf32>
    tpu.vector_store %arg7[%c0_37, %c0_38], %74 {strides = array<i32>} : memref<4x32xf32, #tpu.memory_space<vmem>>, vector<4x32xf32>,
    %c0_39 = arith.constant 0 : index
    %c0_40 = arith.constant 0 : index
    %76 = vector.load %arg9[%c0_39, %c0_40] : memref<4x32xf32, #tpu.memory_space<vmem>>, vector<4x32xf32>
    tpu.vector_store %arg9[%c0_39, %c0_40], %21 {strides = array<i32>} : memref<4x32xf32, #tpu.memory_space<vmem>>, vector<4x32xf32>,
    %c0_41 = arith.constant 0 : index
    %c0_42 = arith.constant 0 : index
    %77 = vector.load %arg4[%c0_41, %c0_42] : memref<32x8xf32, #tpu.memory_space<vmem>>, vector<32x8xf32>
    %cst_43 = arith.constant dense<0.000000e+00> : vector<4x8xf32>
    %78 = tpu.matmul %74, %77, %cst_43 {dimension_numbers = #tpu.dot_dimension_numbers<[1], [0], [0], [1], [0, 0, 1, 1], [], []>} : vector<4x32xf32>, vector<32x8xf32>, vector<4x8xf32> -> vector<4x8xf32>
    %c0_44 = arith.constant 0 : index
    %c0_45 = arith.constant 0 : index
    %79 = vector.load %arg5[%c0_44, %c0_45] : memref<1x8xf32, #tpu.memory_space<vmem>>, vector<1x8xf32>
    %80 = vector.broadcast %79 : vector<1x8xf32> to vector<4x8xf32>
    %81 = arith.addf %78, %80 : vector<4x8xf32>
    %c0_46 = arith.constant 0 : index
    %c0_47 = arith.constant 0 : index
    %82 = vector.load %arg6[%c0_46, %c0_47] : memref<4x8xf32, #tpu.memory_space<vmem>>, vector<4x8xf32>
    tpu.vector_store %arg6[%c0_46, %c0_47], %81 {strides = array<i32>} : memref<4x8xf32, #tpu.memory_space<vmem>>, vector<4x8xf32>,
    return
  }
}

</mosaic_0001>

<llo_original>
// kernel: mlstm_cell_pallas.1
$region0: #{mlstm_cell_pallas.1}
  #allocation0 [shape = 'u32[]', space=smem, size = 0x4, offset = 0x4, fixed_abs, tag = 'smem constant byte address 0x4 - core index']
  #allocation1 [shape = 'u32[144,128]{1,0:T(1,128)}', space=vmem, size = 0x12000, scoped, tag = 'internal scratch']
  %s0 = inlined_call_operand.vmem [shape: f32[4,72], index: 0, kind: input, shape index: {}]
  %s1 = inlined_call_operand.hbm [shape: f32[4,4,32], index: 1, kind: input, shape index: {}, may-alias: {1,8}]
  %s2 = inlined_call_operand.vmem [shape: f32[72,128], index: 2, kind: input, shape index: {}]
  %s3 = inlined_call_operand.vmem [shape: f32[1,128], index: 3, kind: input, shape index: {}]
  %s4 = inlined_call_operand.vmem [shape: f32[32,8], index: 4, kind: input, shape index: {}]
  %s5 = inlined_call_operand.vmem [shape: f32[1,8], index: 5, kind: input, shape index: {}]
  %s6 = inlined_call_operand.hbm [shape: f32[4,8], index: 6, kind: output, shape index: {0}]
  %s7 = inlined_call_operand.hbm [shape: f32[4,32], index: 7, kind: output, shape index: {1}]
  %s8 = inlined_call_operand.hbm [shape: f32[4,4,32], index: 8, kind: output, shape index: {2}, may-alias: {1,8}]
  %s9 = inlined_call_operand.hbm [shape: f32[4,32], index: 9, kind: output, shape index: {3}]
  %10 = xla_tuple %s6, %s7, %s8, %s9
  %s11 = sld [smem:[#allocation0]]
  $region62: #{mlstm_cell_pallas.1} parent=0
    _
  %s13 = ssub.s32 1, %s11
  %s14 = scalar_select 0, %s13, %s11
  $region1: #{mlstm_cell_pallas.1} parent=0
    #allocation2 [shape = 'u8[8192]{0}', space=vmem, size = 0x2000, scoped, tag = 'input window, operand 1, single buffered']
    #allocation3 [shape = 's32[1]{0}', space=sflag, size = 0x4, scoped, tag = 'scoped memory for mlstm_cell_pallas.1']
    #allocation4 [shape = 's32[1]{0}', space=sflag, size = 0x4, scoped, tag = 'scoped memory for mlstm_cell_pallas.1']
    #allocation5 [shape = 'u8[2048]{0}', space=vmem, size = 0x800, scoped, tag = 'output window, operand 0, single buffered']
    #allocation6 [shape = 'u8[2048]{0}', space=vmem, size = 0x800, scoped, tag = 'output window, operand 1, single buffered']
    #allocation7 [shape = 's32[1]{0}', space=sflag, size = 0x4, scoped, tag = 'scoped memory for mlstm_cell_pallas.1']
    #allocation8 [shape = 'u8[8192]{0}', space=vmem, size = 0x2000, scoped, tag = 'output window, operand 2, single buffered']
    #allocation9 [shape = 'u8[2048]{0}', space=vmem, size = 0x800, scoped, tag = 'output window, operand 3, single buffered']
    #allocation10 [shape = 's32[1]{0}', space=sflag, size = 0x4, scoped, tag = 'scoped memory for mlstm_cell_pallas.1']
    %15 = vsyncpa [#allocation3], 0
    %16 = vsyncpa [#allocation4], 0
    %17 = vsyncpa [#allocation7], 0
    %18 = vsyncpa [#allocation10], 0
    // Predicated region
    $region2: #{mlstm_cell_pallas.1} parent=1 // pred_check
      _
    $region3: #{mlstm_cell_pallas.1} parent=1 // pred_check_branch
      %20 = sbr.rel (0) target = $region5
    $region4: #{mlstm_cell_pallas.1} parent=1 // pred_region
      _
    $region5: #{mlstm_cell_pallas.1} parent=1 // pred_fallthru
      _
    // Predicated region
    $region6: #{mlstm_cell_pallas.1} parent=1 // pred_check
      _
    $region7: #{mlstm_cell_pallas.1} parent=1 // pred_check_branch
      %22 = sbr.rel (0) target = $region9
    $region8: #{mlstm_cell_pallas.1} parent=1 // pred_region
      %s24 = ssub.s32 256, 256
      %25 = vsyncadd [#allocation3], %s24
      %s26 = sshll.u32 [#allocation2], 4
      %s27 = int_to_ptr.vmem [resolvable:$true] %s26
      %32 = dma.hbm_to_vmem [thread:$0]  %s1, 256, %s27, [#allocation3], 64, 64, 4
    $region9: #{mlstm_cell_pallas.1} parent=1 // pred_fallthru
      _
    // Predicated region
    $region10: #{mlstm_cell_pallas.1} parent=1 // pred_check
      _
    $region11: #{mlstm_cell_pallas.1} parent=1 // pred_check_branch
      %34 = sbr.rel (0) target = $region13
    $region12: #{mlstm_cell_pallas.1} parent=1 // pred_region
      _
    $region13: #{mlstm_cell_pallas.1} parent=1 // pred_fallthru
      _
    // Predicated region
    $region14: #{mlstm_cell_pallas.1} parent=1 // pred_check
      _
    $region15: #{mlstm_cell_pallas.1} parent=1 // pred_check_branch
      %36 = sbr.rel (0) target = $region17
    $region16: #{mlstm_cell_pallas.1} parent=1 // pred_region
      _
    $region17: #{mlstm_cell_pallas.1} parent=1 // pred_fallthru
      _
    // Predicated region
    $region18: #{mlstm_cell_pallas.1} parent=1 // pred_check
      _
    $region19: #{mlstm_cell_pallas.1} parent=1 // pred_check_branch
      %38 = sbr.rel (0) target = $region21
    $region20: #{mlstm_cell_pallas.1} parent=1 // pred_region
      _
    $region21: #{mlstm_cell_pallas.1} parent=1 // pred_fallthru
      _
    // Predicated region
    $region22: #{mlstm_cell_pallas.1} parent=1 // pred_check
      _
    $region23: #{mlstm_cell_pallas.1} parent=1 // pred_check_branch
      %40 = sbr.rel (0) target = $region25
    $region24: #{mlstm_cell_pallas.1} parent=1 // pred_region
      _
    $region25: #{mlstm_cell_pallas.1} parent=1 // pred_fallthru
      _
    // Predicated region
    $region26: #{mlstm_cell_pallas.1} parent=1 // pred_check
      _
    $region27: #{mlstm_cell_pallas.1} parent=1 // pred_check_branch
      %42 = sbr.rel (0) target = $region29
    $region28: #{mlstm_cell_pallas.1} parent=1 // pred_region
      %43 = dma.done [#allocation3], 256
    $region29: #{mlstm_cell_pallas.1} parent=1 // pred_fallthru
      _
    %v44 = vld [vmem:[%s0] sm:$0xf]
    %v45 = vld [vmem:[%s2] sm:$0xff]
    %v46 = vld [vmem:[%s2 + $0x8] sm:$0xff]
    %v47 = vld [vmem:[%s2 + $0x10] sm:$0xff]
    %v48 = vld [vmem:[%s2 + $0x18] sm:$0xff]
    %v49 = vld [vmem:[%s2 + $0x20] sm:$0xff]
    %v50 = vld [vmem:[%s2 + $0x28] sm:$0xff]
    %v51 = vld [vmem:[%s2 + $0x30] sm:$0xff]
    %v52 = vld [vmem:[%s2 + $0x38] sm:$0xff]
    %v53 = vld [vmem:[%s2 + $0x40] sm:$0xff]
    %v54 = vld [vmem:[%s3] sm:$0x1]
    %v56 = vlaneseq
    %v57 = vshrl.u32 %v56, 7
    %v58 = vsub.s32 0, %v57
    %v59 = vrot.slane %v54, %v58
    %vm61 = vcmask 588800
    %v63 = vsel %vm61, %v44, 0
    %65 = vmatprep.subr.mxu0 0.0
    %66 = vmatpush1.msra.mxu0 %v45
    %67 = vmatprep.subr.mxu0 0.0
    %68 = vmatpush1.msra.mxu0 %v46
    %69 = vmatprep.subr.mxu0 0.0
    %70 = vmatpush1.msra.mxu0 %v47
    %71 = vmatprep.subr.mxu0 0.0
    %72 = vmatpush1.msra.mxu0 %v48
    %73 = vmatprep.subr.mxu0 0.0
    %74 = vmatpush1.msra.mxu0 %v49
    %75 = vmatprep.subr.mxu0 0.0
    %76 = vmatpush1.msra.mxu0 %v50
    %77 = vmatprep.subr.mxu0 0.0
    %78 = vmatpush1.msra.mxu0 %v51
    %79 = vmatprep.subr.mxu0 0.0
    %80 = vmatpush1.msra.mxu0 %v52
    %81 = vmatprep.subr.mxu0 0.0
    %82 = vmatpush1.msra.mxu0 %v53
    %83 = vmatprep.subr.mxu0 0.0
    %84 = vmatpush1.msra.mxu0 0.0
    %85 = vmatprep.subr.mxu0 0.0
    %86 = vmatpush1.msra.mxu0 0.0
    %87 = vmatprep.subr.mxu0 0.0
    %88 = vmatpush1.msra.mxu0 0.0
    %89 = vmatprep.subr.mxu0 0.0
    %90 = vmatpush1.msra.mxu0 0.0
    %91 = vmatprep.subr.mxu0 0.0
    %92 = vmatpush1.msra.mxu0 0.0
    %93 = vmatprep.subr.mxu0 0.0
    %94 = vmatpush1.msra.mxu0 0.0
    %95 = vmatprep.subr.mxu0 0.0
    %96 = vmatpush1.msra.mxu0 0.0
    %97 = vmatprep.subr.mxu0 0.0
    %98 = vmatpush1.msra.mxu0 0.0
    %99 = vmatprep.subr.mxu0 0.0
    %100 = vmatpush1.msra.mxu0 0.0
    %101 = vmatprep.subr.mxu0 0.0
    %102 = vmatpush1.msra.mxu0 0.0
    %103 = vmatprep.subr.mxu0 0.0
    %104 = vmatpush1.msra.mxu0 0.0
    %105 = vmatprep.subr.mxu0 0.0
    %106 = vmatpush1.msra.mxu0 0.0
    %107 = vmatprep.subr.mxu0 0.0
    %108 = vmatpush1.msra.mxu0 0.0
    %109 = vmatprep.subr.mxu0 0.0
    %110 = vmatpush1.msra.mxu0 0.0
    %111 = vmatprep.subr.mxu0 0.0
    %112 = vmatpush1.msra.mxu0 0.0
    %113 = vmatprep.subr.mxu0 0.0
    %114 = vmatpush1.msra.mxu0 0.0
    %115 = vmatprep.subr.mxu0 0.0
    %116 = vmatpush1.msra.mxu0 0.0
    %117 = vmatprep.subr.mxu0 0.0
    %118 = vmatpush1.msra.mxu0 0.0
    %119 = vmatprep.subr.mxu0 0.0
    %120 = vmatpush1.msra.mxu0 0.0
    %121 = vmatprep.subr.mxu0 0.0
    %122 = vmatpush1.msra.mxu0 0.0
    %123 = vmatprep.subr.mxu0 0.0
    %124 = vmatpush1.msra.mxu0 0.0
    %125 = vmatprep.subr.mxu0 0.0
    %126 = vmatpush1.msra.mxu0 0.0
    %127 = vmatprep.subr.mxu0 0.0
    %128 = vmatpush1.msra.mxu0 0.0
    %129 = vmatprep.mubr.f32.mxu0 0.0
    %130 = vmatmul.mubr.f32.gmra.mrb[0].mxu0 %v63
    %v131 = vpop.f32.mrb[0].mxu0
    %v132 = vadd.f32 %v59, %v131
    %v133 = vpop.f32.mrb[0].mxu0
    %134 = vdwg.mxu0
    %v135 = vtanh.pop %v132
    %v136 = vxor.u32 %v132, 2147483648
    %v137 = vmul.f32 %v136, 1.442695
    %v138 = vpow.pop %v137
    %v139 = vadd.f32 %v138, 1.0
    %v140 = vrcp.pop %v139
    %v141 = vmul.f32 1.0, %v140
    %v142 = vmul.f32 %v141, 0.5
    %v143 = vsub.f32 0.0, %v142
    %s144 = scalar_lea.vmem [#allocation2], 12
    %v145 = vld [vmem:[%s144] sm:$0xf]
    %147 = vrot.lane.b32.xlu0 %v143, 64
    %v148 = vpop.permute.xlu0 %147
    %v150 = vmul.f32 %v145, %v148
    %v151 = vadd.f32 %v150, 0.0
    %v152 = vsub.f32 1.0, %v142
    %v153 = vmul.f32 %v152, 0.5
    %v154 = vmul.f32 %v143, %v153
    %s155 = scalar_lea.vmem [#allocation2], 8
    %v156 = vld [vmem:[%s155] sm:$0xf]
    %158 = vrot.lane.b32.xlu0 %v154, 64
    %v159 = vpop.permute.xlu0 %158
    %v161 = vmul.f32 %v156, %v159
    %v162 = vadd.f32 %v151, %v161
    %v163 = vsub.f32 2.0, %v142
    %v164 = vmul.f32 %v163, 0.33333334
    %v165 = vmul.f32 %v154, %v164
    %s166 = scalar_lea.vmem [#allocation2], 4
    %v167 = vld [vmem:[%s166] sm:$0xf]
    %169 = vrot.lane.b32.xlu0 %v165, 64
    %v170 = vpop.permute.xlu0 %169
    %v172 = vmul.f32 %v167, %v170
    %v173 = vadd.f32 %v162, %v172
    %v174 = vsub.f32 3.0, %v142
    %v175 = vmul.f32 %v174, 0.25
    %v176 = vmul.f32 %v165, %v175
    %v177 = vld [vmem:[#allocation2] sm:$0xf]
    %179 = vrot.lane.b32.xlu0 %v176, 64
    %v180 = vpop.permute.xlu0 %179
    %v182 = vmul.f32 %v177, %v180
    %v183 = vadd.f32 %v173, %v182
    %185 = vrot.lane.b32.xlu0 %v141, 96
    %v186 = vpop.permute.xlu0 %185
    %v188 = vmul.f32 %v135, %v186
    %v189 = vsub.f32 %v188, %v183
    %v190 = vld [vmem:[%s166 + $0x4] sm:$0xf]
    %v191 = vld [vmem:[%s166 + $0x8] sm:$0xf]
    %vm192 = vcmask 257024
    %193 = vst.msk [vmem:[#allocation8] sm:$0xf] %vm192, %v167
    %194 = vst.msk [vmem:[#allocation8 + $0x4] sm:$0xf] %vm192, %v190
    %195 = vst.msk [vmem:[#allocation8 + $0x8] sm:$0xf] %vm192, %v191
    %s196 = scalar_lea.vmem [#allocation8], 12
    %197 = vst.msk [vmem:[%s196] sm:$0xf] %vm192, %v189
    %v198 = vtanh.pop %v189
    %199 = vrot.lane.b32.xlu0 %v141, 32
    %v200 = vpop.permute.xlu0 %199
    %v202 = vmul.f32 %v198, %v200
    %203 = vst.msk [vmem:[#allocation6] sm:$0xf] %vm192, %v202
    %205 = vrot.lane.b32.xlu0 %v142, 64
    %v206 = vpop.permute.xlu0 %205
    %208 = vst.msk [vmem:[#allocation9] sm:$0xf] %vm192, %v206
    %v209 = vld [vmem:[%s4] sm:$0xff]
    %v210 = vld [vmem:[%s4 + $0x8] sm:$0xff]
    %v211 = vld [vmem:[%s4 + $0x10] sm:$0xff]
    %v212 = vld [vmem:[%s4 + $0x18] sm:$0xff]
    %v213 = vld [vmem:[%s5] sm:$0x1]
    %v215 = vlaneseq
    %v216 = vshrl.u32 %v215, 7
    %v217 = vsub.s32 0, %v216
    %v218 = vrot.slane %v213, %v217
    %vm220 = vcmask 261120
    %v222 = vsel %vm220, %v202, 0
    %224 = vmatprep.subr.mxu0 0.0
    %225 = vmatpush1.msra.mxu0 %v209
    %226 = vmatprep.subr.mxu0 0.0
    %227 = vmatpush1.msra.mxu0 %v210
    %228 = vmatprep.subr.mxu0 0.0
    %229 = vmatpush1.msra.mxu0 %v211
    %230 = vmatprep.subr.mxu0 0.0
    %231 = vmatpush1.msra.mxu0 %v212
    %232 = vmatprep.subr.mxu0 0.0
    %233 = vmatpush1.msra.mxu0 0.0
    %234 = vmatprep.subr.mxu0 0.0
    %235 = vmatpush1.msra.mxu0 0.0
    %236 = vmatprep.subr.mxu0 0.0
    %237 = vmatpush1.msra.mxu0 0.0
    %238 = vmatprep.subr.mxu0 0.0
    %239 = vmatpush1.msra.mxu0 0.0
    %240 = vmatprep.subr.mxu0 0.0
    %241 = vmatpush1.msra.mxu0 0.0
    %242 = vmatprep.subr.mxu0 0.0
    %243 = vmatpush1.msra.mxu0 0.0
    %244 = vmatprep.subr.mxu0 0.0
    %245 = vmatpush1.msra.mxu0 0.0
    %246 = vmatprep.subr.mxu0 0.0
    %247 = vmatpush1.msra.mxu0 0.0
    %248 = vmatprep.subr.mxu0 0.0
    %249 = vmatpush1.msra.mxu0 0.0
    %250 = vmatprep.subr.mxu0 0.0
    %251 = vmatpush1.msra.mxu0 0.0
    %252 = vmatprep.subr.mxu0 0.0
    %253 = vmatpush1.msra.mxu0 0.0
    %254 = vmatprep.subr.mxu0 0.0
    %255 = vmatpush1.msra.mxu0 0.0
    %256 = vmatprep.subr.mxu0 0.0
    %257 = vmatpush1.msra.mxu0 0.0
    %258 = vmatprep.subr.mxu0 0.0
    %259 = vmatpush1.msra.mxu0 0.0
    %260 = vmatprep.subr.mxu0 0.0
    %261 = vmatpush1.msra.mxu0 0.0
    %262 = vmatprep.subr.mxu0 0.0
    %263 = vmatpush1.msra.mxu0 0.0
    %264 = vmatprep.subr.mxu0 0.0
    %265 = vmatpush1.msra.mxu0 0.0
    %266 = vmatprep.subr.mxu0 0.0
    %267 = vmatpush1.msra.mxu0 0.0
    %268 = vmatprep.subr.mxu0 0.0
    %269 = vmatpush1.msra.mxu0 0.0
    %270 = vmatprep.subr.mxu0 0.0
    %271 = vmatpush1.msra.mxu0 0.0
    %272 = vmatprep.subr.mxu0 0.0
    %273 = vmatpush1.msra.mxu0 0.0
    %274 = vmatprep.subr.mxu0 0.0
    %275 = vmatpush1.msra.mxu0 0.0
    %276 = vmatprep.subr.mxu0 0.0
    %277 = vmatpush1.msra.mxu0 0.0
    %278 = vmatprep.subr.mxu0 0.0
    %279 = vmatpush1.msra.mxu0 0.0
    %280 = vmatprep.subr.mxu0 0.0
    %281 = vmatpush1.msra.mxu0 0.0
    %282 = vmatprep.subr.mxu0 0.0
    %283 = vmatpush1.msra.mxu0 0.0
    %284 = vmatprep.subr.mxu0 0.0
    %285 = vmatpush1.msra.mxu0 0.0
    %286 = vmatprep.subr.mxu0 0.0
    %287 = vmatpush1.msra.mxu0 0.0
    %288 = vmatprep.mubr.f32.mxu0 0.0
    %289 = vmatmul.mubr.f32.gmra.mrb[0].mxu0 %v222
    %v290 = vpop.f32.mrb[0].mxu0
    %v291 = vadd.f32 %v218, %v290
    %v292 = vpop.f32.mrb[0].mxu0
    %293 = vdwg.mxu0
    %vm294 = vcmask 60416
    %295 = vst.msk [vmem:[#allocation5] sm:$0xf] %vm294, %v291
    // Predicated region
    $region30: #{mlstm_cell_pallas.1} parent=1 // pred_check
      _
    $region31: #{mlstm_cell_pallas.1} parent=1 // pred_check_branch
      %297 = sbr.rel (0) target = $region33
    $region32: #{mlstm_cell_pallas.1} parent=1 // pred_region
      %s299 = ssub.s32 64, 64
      %300 = vsyncadd [#allocation4], %s299
      %s302 = sshll.u32 [#allocation5], 4
      %s303 = int_to_ptr.vmem [resolvable:$true] %s302
      %305 = dma.vmem_to_hbm [thread:$0]  %s303, 64, %s6, [#allocation4]
    $region33: #{mlstm_cell_pallas.1} parent=1 // pred_fallthru
      _
    // Predicated region
    $region34: #{mlstm_cell_pallas.1} parent=1 // pred_check
      _
    $region35: #{mlstm_cell_pallas.1} parent=1 // pred_check_branch
      %307 = sbr.rel (0) target = $region37
    $region36: #{mlstm_cell_pallas.1} parent=1 // pred_region
      %s309 = ssub.s32 64, 64
      %310 = vsyncadd [#allocation7], %s309
      %s312 = sshll.u32 [#allocation6], 4
      %s313 = int_to_ptr.vmem [resolvable:$true] %s312
      %315 = dma.vmem_to_hbm [thread:$0]  %s313, 64, %s7, [#allocation7]
    $region37: #{mlstm_cell_pallas.1} parent=1 // pred_fallthru
      _
    // Predicated region
    $region38: #{mlstm_cell_pallas.1} parent=1 // pred_check
      _
    $region39: #{mlstm_cell_pallas.1} parent=1 // pred_check_branch
      %317 = sbr.rel (0) target = $region41
    $region40: #{mlstm_cell_pallas.1} parent=1 // pred_region
      %s319 = ssub.s32 256, 256
      %320 = vsyncadd [#allocation7], %s319
      %s321 = sshll.u32 [#allocation8], 4
      %s322 = int_to_ptr.vmem [resolvable:$true] %s321
      %327 = dma.vmem_to_hbm [thread:$0]  %s322, 256, %s8, [#allocation7], 64, 64, 4
    $region41: #{mlstm_cell_pallas.1} parent=1 // pred_fallthru
      _
    // Predicated region
    $region42: #{mlstm_cell_pallas.1} parent=1 // pred_check
      _
    $region43: #{mlstm_cell_pallas.1} parent=1 // pred_check_branch
      %329 = sbr.rel (0) target = $region45
    $region44: #{mlstm_cell_pallas.1} parent=1 // pred_region
      %s331 = ssub.s32 64, 64
      %332 = vsyncadd [#allocation10], %s331
      %s334 = sshll.u32 [#allocation9], 4
      %s335 = int_to_ptr.vmem [resolvable:$true] %s334
      %337 = dma.vmem_to_hbm [thread:$0]  %s335, 64, %s9, [#allocation10]
    $region45: #{mlstm_cell_pallas.1} parent=1 // pred_fallthru
      _
    // Predicated region
    $region46: #{mlstm_cell_pallas.1} parent=1 // pred_check
      _
    $region47: #{mlstm_cell_pallas.1} parent=1 // pred_check_branch
      %339 = sbr.rel (0) target = $region49
    $region48: #{mlstm_cell_pallas.1} parent=1 // pred_region
      %340 = dma.done [#allocation4], 64
    $region49: #{mlstm_cell_pallas.1} parent=1 // pred_fallthru
      _
    // Predicated region
    $region50: #{mlstm_cell_pallas.1} parent=1 // pred_check
      _
    $region51: #{mlstm_cell_pallas.1} parent=1 // pred_check_branch
      %342 = sbr.rel (0) target = $region53
    $region52: #{mlstm_cell_pallas.1} parent=1 // pred_region
      %343 = dma.done [#allocation7], 64
    $region53: #{mlstm_cell_pallas.1} parent=1 // pred_fallthru
      _
    // Predicated region
    $region54: #{mlstm_cell_pallas.1} parent=1 // pred_check
      _
    $region55: #{mlstm_cell_pallas.1} parent=1 // pred_check_branch
      %345 = sbr.rel (0) target = $region57
    $region56: #{mlstm_cell_pallas.1} parent=1 // pred_region
      %346 = dma.done [#allocation7], 256
    $region57: #{mlstm_cell_pallas.1} parent=1 // pred_fallthru
      _
    // Predicated region
    $region58: #{mlstm_cell_pallas.1} parent=1 // pred_check
      _
    $region59: #{mlstm_cell_pallas.1} parent=1 // pred_check_branch
      %348 = sbr.rel (0) target = $region61
    $region60: #{mlstm_cell_pallas.1} parent=1 // pred_region
      %349 = dma.done [#allocation10], 64
    $region61: #{mlstm_cell_pallas.1} parent=1 // pred_fallthru
      _
    %350 = vsyncpa [#allocation3], 1
    %351 = vsyncpa [#allocation4], 1
    %352 = vsyncpa [#allocation7], 1
    %353 = vsyncpa [#allocation10], 1

</llo_original>
